<compile_context>
chip_gen: v7x
topology: tpu7x:2x2x1
jax: 0.10.0
libtpu: 0.0.40
codegen_flags: <defaults>
</compile_context>

<pallas_src>
import functools

import jax
import jax.numpy as jnp
from jax.experimental import pallas as pl
from jax.experimental.pallas import tpu as pltpu

ALPHA = 0.25
GAMMA = 2.0

_LANE = 128
_MIN_PALLAS_COLS = 128   # narrower tensors would waste >= 7/8 of every vreg


def _pow(x, gamma):
    # x > 0 is guaranteed (q is clipped to [1e-7, 1-1e-7]).
    if float(gamma) == 2.0:
        return x * x
    return jnp.power(x, gamma)


def _target_coeff(tgt, alpha):
    """Cast the {0,1} target to f32 and fold the focal sign/alpha weighting into
    one linear-in-target coefficient: -alpha where tgt==1, -(1-alpha) where
    tgt==0.  (The PyTorch reference gives non-binary targets zero weight; a
    thresholded mask after nearest downsampling is strictly binary, so the
    linear form is exactly equivalent.)"""
    tgt32 = tgt.astype(jnp.float32)
    coeff = (1.0 - 2.0 * alpha) * tgt32 + (alpha - 1.0)
    return tgt32, coeff


def _focal_partial(pred, tgt32, coeff, gamma):
    """Masked focal-loss partial sums: (sum of per-element losses over the
    mask-selected rows, number of selected rows)."""
    pred32 = pred.astype(jnp.float32)
    # Row validity on the UNCLAMPED scores: ~(pred.sum(dim=1) == 0).
    row_mask = (jnp.sum(pred32, axis=1, keepdims=True) != 0.0).astype(jnp.float32)
    p = jnp.clip(pred32, 1e-7, 1.0 - 1e-7)
    q = tgt32 * (2.0 * p - 1.0) + (1.0 - p)          # p if tgt==1 else 1-p
    per_elem = coeff * _pow(1.0 - q, gamma) * jnp.log(q) * row_mask
    return jnp.sum(per_elem), jnp.sum(row_mask)


def _focal_mean_xla(pred, tgt, alpha, gamma):
    """Plain-XLA fallback for lane-sparse (< 128 column) score tensors."""
    tgt32, coeff = _target_coeff(tgt, alpha)
    loss_sum, row_cnt = _focal_partial(pred, tgt32, coeff, gamma)
    return loss_sum / (row_cnt * pred.shape[1])


def _score_stats_kernel(*refs, n_blocks, n_streams, alpha, gamma):
    """One row tile: partial (loss sum, valid-row count) for every
    (stream, block) pair, packed into a single (8, 128) f32 output tile:
        sublane 2*s   : loss sums  of stream s   (lane = block index)
        sublane 2*s+1 : row counts of stream s   (lane = block index)
    Input refs are laid out as  [gt_0, pred_0_b0..pred_0_b{n-1}, gt_1, ...]."""
    out_ref = refs[-1]
    sub = jax.lax.broadcasted_iota(jnp.int32, (8, _LANE), 0)
    lane = jax.lax.broadcasted_iota(jnp.int32, (8, _LANE), 1)
    out = jnp.zeros((8, _LANE), jnp.float32)

    for s in range(n_streams):
        base = s * (n_blocks + 1)
        # Target-only factors hoisted out of the block loop.
        tgt32, coeff = _target_coeff(refs[base][...], alpha)
        for b in range(n_blocks):
            loss_sum, row_cnt = _focal_partial(refs[base + 1 + b][...],
                                               tgt32, coeff, gamma)
            out = jnp.where((sub == 2 * s) & (lane == b), loss_sum, out)
            out = jnp.where((sub == 2 * s + 1) & (lane == b), row_cnt, out)

    out_ref[...] = out      # one lane-dense, unmasked 4 KiB store per grid step


def _sublane(itemsize):
    return {4: 8, 2: 16, 1: 32}.get(int(itemsize), 8)


def _vmem_budget():
    """Generation-aware (tile budget, vmem_limit_bytes)."""
    try:
        cap = int(pltpu.get_tpu_info().vmem_capacity_bytes)
    except Exception:
        cap = 64 * 1024 * 1024              # v7x-safe fallback
    tile_budget = cap // 4                  # 32 MiB on v5e/v6e, 16 MiB on v7x
    vmem_limit = min((cap * 3) // 4, 96 * 1024 * 1024)
    return tile_budget, vmem_limit


def _pick_row_tiling(n_rows, per_row_bytes, sublane, budget):
    """Row tile (multiple of `sublane`) that near-evenly divides n_rows; uses
    >= 2 tiles when there are enough rows so the 'parallel' grid axis can shard
    across v7x's two TensorCores."""
    cap = max(sublane, budget // max(per_row_bytes, 1))
    n_tiles = max(1, -(-n_rows // cap))
    if n_rows >= 2 * sublane:
        n_tiles = max(n_tiles, 2)
    tb = -(-n_rows // n_tiles)                  # ceil(n_rows / n_tiles)
    tb = -(-tb // sublane) * sublane            # round up to sublane multiple
    if tb >= n_rows:
        return n_rows, 1
    return tb, -(-n_rows // tb)


def score_loss(f_q, gt, alpha=ALPHA, gamma=GAMMA):
    """f_q: list of dicts with 'pos_scores_s' (B, C*(H//8)*(W//8)) and
    'pos_scores_l' (B, C*(H//32)*(W//32)); gt: (B, C, H, W) binary mask."""
    n_blocks = len(f_q)
    assert n_blocks >= 1
    B = gt.shape[0]
    pred_dtype = f_q[0]['pos_scores_s'].dtype

    # F.interpolate(mode='nearest', scale_factor=1/8 | 1/32) on NCHW is a
    # strided slice for integer factors; gt28 reuses gt8 (::8 then ::4 == ::32)
    # so full-resolution gt is only read once. Cast is lossless (gt is {0,1}).
    # TODO(synk): non multiple-of-32 H/W would need a floor-sized gather resize.
    gt8_4d = gt[:, :, ::8, ::8]
    gt8 = gt8_4d.reshape(B, -1).astype(pred_dtype)
    gt28 = gt8_4d[:, :, ::4, ::4].reshape(B, -1).astype(pred_dtype)

    streams = []
    for name, tgt in (('pos_scores_s', gt8), ('pos_scores_l', gt28)):
        preds = [blk[name] for blk in f_q]
        n_cols = preds[0].shape[1]
        assert tgt.shape == (B, n_cols)
        streams.append(dict(name=name, tgt=tgt, preds=preds, n_cols=n_cols,
                            pallas=n_cols >= _MIN_PALLAS_COLS))

    pallas_streams = [s for s in streams if s['pallas']]
    fl = {}   # stream name -> (n_blocks,) per-block focal means

    if pallas_streams:
        assert n_blocks <= _LANE and 2 * len(pallas_streams) <= 8
        itemsize = max(int(jnp.dtype(p.dtype).itemsize)
                       for s in pallas_streams for p in s['preds'])
        sublane = _sublane(itemsize)
        budget, vmem_limit = _vmem_budget()
        max_cols = max(s['n_cols'] for s in pallas_streams)
        # double-buffered inputs + ~8 live f32 (tb, N) temporaries in the body
        per_row = (sum((n_blocks + 1) * s['n_cols'] for s in pallas_streams)
                   * itemsize * 2 + 8 * max_cols * 4)
        tb, n_tiles = _pick_row_tiling(B, per_row, sublane, budget)

        def maybe_pad(x):
            bp = tb * n_tiles
            if bp == B:
                return x
            # Rare ragged tail (at most sublane-1 rows): zero rows have
            # row_sum == 0 so the validity mask excludes them.
            return jnp.pad(x, ((0, bp - B), (0, 0)))

        inputs, in_specs = [], []
        for s in pallas_streams:
            spec = pl.BlockSpec((tb, s['n_cols']), lambda r: (r, 0))
            inputs.append(maybe_pad(s['tgt']))
            in_specs.append(spec)
            for p in s['preds']:
                inputs.append(maybe_pad(p))
                in_specs.append(spec)

        total_elems = sum(tb * n_tiles * s['n_cols']
                          for s in pallas_streams) * n_blocks
        cost = pl.CostEstimate(
            flops=int(14 * total_elems),
            transcendentals=int((1 if float(gamma) == 2.0 else 2) * total_elems),
            bytes_accessed=int(sum(int(x.size) * int(jnp.dtype(x.dtype).itemsize)
                                   for x in inputs) + n_tiles * 8 * _LANE * 4),
        )

        kernel = functools.partial(
            _score_stats_kernel, n_blocks=n_blocks,
            n_streams=len(pallas_streams), alpha=float(alpha),
            gamma=float(gamma))

        stats = pl.pallas_call(
            kernel,
            grid=(n_tiles,),
            in_specs=in_specs,
            out_specs=pl.BlockSpec((None, 8, _LANE), lambda r: (r, 0, 0)),
            out_shape=jax.ShapeDtypeStruct((n_tiles, 8, _LANE), jnp.float32),
            compiler_params=pltpu.CompilerParams(
                dimension_semantics=("parallel",),
                vmem_limit_bytes=int(vmem_limit)),
            cost_estimate=cost,
        )(*inputs)

        stats = stats.sum(axis=0)                      # (8, 128): sum over tiles
        for si, s in enumerate(pallas_streams):
            sums = stats[2 * si, :n_blocks]
            cnts = stats[2 * si + 1, :n_blocks]
            # torch .mean() over the mask-selected (rows, N) slab.
            # (0 valid rows -> inf/nan, matching torch's mean of an empty tensor.)
            fl[s['name']] = sums / (cnts * s['n_cols'])

    # Lane-sparse streams (< 128 columns, e.g. the 1/32-scale scores at small
    # resolutions): plain XLA beats wasting 7/8 of every vreg inside the kernel,
    # and their HBM bytes are a small fraction of the 's' stream.
    for s in streams:
        if not s['pallas']:
            fl[s['name']] = jnp.stack(
                [_focal_mean_xla(p, s['tgt'], float(alpha), float(gamma))
                 for p in s['preds']])

    per_block = 0.5 * (fl['pos_scores_s'] + fl['pos_scores_l'])
    return jnp.sum(per_block) / n_blocks


def _reference_score_loss(f_q, gt, alpha=ALPHA, gamma=GAMMA):
    """Pure-JAX (eager) transcription of the PyTorch module, for validation."""
    B = gt.shape[0]
    gt8 = gt[:, :, ::8, ::8].reshape(B, -1)
    gt28 = gt[:, :, ::32, ::32].reshape(B, -1)

    def focal(pred, tgt):
        p = jnp.clip(pred, 1e-7, 1.0 - 1e-7)
        pos = (tgt == 1).astype(jnp.float32)
        neg = (tgt == 0).astype(jnp.float32)
        pos_l = -alpha * jnp.power(1.0 - p, gamma) * jnp.log(p) * pos
        neg_l = -(1.0 - alpha) * jnp.power(p, gamma) * jnp.log(1.0 - p) * neg
        return (pos_l + neg_l).mean()

    loss = 0.0
    for blk in f_q:
        ms = ~(blk['pos_scores_s'].sum(axis=1) == 0)
        ml = ~(blk['pos_scores_l'].sum(axis=1) == 0)
        fs = focal(blk['pos_scores_s'][ms], gt8[ms])
        fl_ = focal(blk['pos_scores_l'][ml], gt28[ml])
        loss = loss + 0.5 * (fs + fl_)
    return loss / len(f_q)


if __name__ == "__main__":
    key = jax.random.PRNGKey(0)
    B, C, H, W = 8, 1, 128, 128
    n_blocks = 3

    k_gt, k_scores = jax.random.split(key)
    gt = (jax.random.uniform(k_gt, (B, C, H, W)) > 0.5).astype(jnp.float32)

    Ns = C * (H // 8) * (W // 8)     # 256 -> handled by the Pallas kernel
    Nl = C * (H // 32) * (W // 32)   # 16  -> lane-sparse, handled in plain XLA

    ks = jax.random.split(k_scores, 2 * n_blocks)
    f_q = []
    for b in range(n_blocks):
        s = jax.random.uniform(ks[2 * b], (B, Ns), minval=0.05, maxval=0.95,
                               dtype=jnp.float32)
        l = jax.random.uniform(ks[2 * b + 1], (B, Nl), minval=0.05, maxval=0.95,
                               dtype=jnp.float32)
        f_q.append({'pos_scores_s': s, 'pos_scores_l': l})
    # Exercise the invalid-row masking path: one all-zero score row in block 1.
    f_q[1]['pos_scores_s'] = f_q[1]['pos_scores_s'].at[3].set(0.0)

    loss = jax.jit(score_loss)(f_q, gt)
    jax.block_until_ready(loss)

    ref = _reference_score_loss(f_q, gt)
    assert jnp.allclose(loss, ref, rtol=5e-4, atol=1e-6), (loss, ref)

    print("KERNEL_OK")
</pallas_src>

<mosaic_0001>
module attributes {stable_mosaic.version = 11 : i64} {
  func.func @_score_stats_kernel(%arg0: i32, %arg1: memref<8x256xf32, #tpu.memory_space<vmem>>, %arg2: memref<8x256xf32, #tpu.memory_space<vmem>>, %arg3: memref<8x256xf32, #tpu.memory_space<vmem>>, %arg4: memref<8x256xf32, #tpu.memory_space<vmem>>, %arg5: memref<1x8x128xf32, #tpu.memory_space<vmem>>) attributes {dimension_semantics = [#tpu.dimension_semantics<parallel>], iteration_bounds = array<i64: 1>, scalar_prefetch = 0 : i64, scratch_operands = 0 : i64, tpu.core_type = #tpu.core_type<tc>, window_params = [{transform_indices = @transform_0, window_bounds = array<i64: 8, 256>}, {transform_indices = @transform_1, window_bounds = array<i64: 8, 256>}, {transform_indices = @transform_2, window_bounds = array<i64: 8, 256>}, {transform_indices = @transform_3, window_bounds = array<i64: 8, 256>}, {transform_indices = @transform_4, window_bounds = array<i64: 1, 8, 128>}]} {
    %0 = tpu.iota {dimensions = array<i32: 0>} : vector<8x128xi32>
    %1 = tpu.iota {dimensions = array<i32: 1>} : vector<8x128xi32>
    %cst = arith.constant 0.000000e+00 : f32
    %2 = vector.broadcast %cst : f32 to vector<8x128xf32>
    %c0 = arith.constant 0 : index
    %c0_0 = arith.constant 0 : index
    %3 = vector.load %arg1[%c0, %c0_0] : memref<8x256xf32, #tpu.memory_space<vmem>>, vector<8x256xf32>
    %cst_1 = arith.constant 5.000000e-01 : f32
    %4 = vector.broadcast %cst_1 : f32 to vector<8x256xf32>
    %5 = arith.mulf %4, %3 : vector<8x256xf32>
    %cst_2 = arith.constant -7.500000e-01 : f32
    %6 = vector.broadcast %cst_2 : f32 to vector<8x256xf32>
    %7 = arith.addf %5, %6 : vector<8x256xf32>
    %c0_3 = arith.constant 0 : index
    %c0_4 = arith.constant 0 : index
    %8 = vector.load %arg2[%c0_3, %c0_4] : memref<8x256xf32, #tpu.memory_space<vmem>>, vector<8x256xf32>
    %cst_5 = arith.constant dense<0.000000e+00> : vector<8xf32>
    %9 = vector.multi_reduction <add>, %8, %cst_5 [1] : vector<8x256xf32> to vector<8xf32>
    %10 = vector.shape_cast %9 : vector<8xf32> to vector<8x1xf32>
    %cst_6 = arith.constant 0.000000e+00 : f32
    %11 = vector.broadcast %cst_6 : f32 to vector<8x1xf32>
    %12 = arith.cmpf one, %10, %11 : vector<8x1xf32>
    %13 = arith.extui %12 : vector<8x1xi1> to vector<8x1xi32>
    %14 = arith.sitofp %13 : vector<8x1xi32> to vector<8x1xf32>
    %cst_7 = arith.constant 1.000000e-07 : f32
    %cst_8 = arith.constant 0.99999988 : f32
    %15 = vector.broadcast %cst_7 : f32 to vector<8x256xf32>
    %16 = arith.maximumf %15, %8 : vector<8x256xf32>
    %17 = vector.broadcast %cst_8 : f32 to vector<8x256xf32>
    %18 = arith.minimumf %17, %16 : vector<8x256xf32>
    %cst_9 = arith.constant 2.000000e+00 : f32
    %19 = vector.broadcast %cst_9 : f32 to vector<8x256xf32>
    %20 = arith.mulf %19, %18 : vector<8x256xf32>
    %cst_10 = arith.constant 1.000000e+00 : f32
    %21 = vector.broadcast %cst_10 : f32 to vector<8x256xf32>
    %22 = arith.subf %20, %21 : vector<8x256xf32>
    %23 = arith.mulf %3, %22 : vector<8x256xf32>
    %cst_11 = arith.constant 1.000000e+00 : f32
    %24 = vector.broadcast %cst_11 : f32 to vector<8x256xf32>
    %25 = arith.subf %24, %18 : vector<8x256xf32>
    %26 = arith.addf %23, %25 : vector<8x256xf32>
    %cst_12 = arith.constant 1.000000e+00 : f32
    %27 = vector.broadcast %cst_12 : f32 to vector<8x256xf32>
    %28 = arith.subf %27, %26 : vector<8x256xf32>
    %29 = arith.mulf %28, %28 : vector<8x256xf32>
    %30 = arith.mulf %7, %29 : vector<8x256xf32>
    %31 = math.log %26 : vector<8x256xf32>
    %32 = arith.mulf %30, %31 : vector<8x256xf32>
    %33 = vector.broadcast %14 : vector<8x1xf32> to vector<8x256xf32>
    %34 = arith.mulf %32, %33 : vector<8x256xf32>
    %35 = vector.shape_cast %34 : vector<8x256xf32> to vector<1x8x256xf32>
    %cst_13 = arith.constant dense<0.000000e+00> : vector<1xf32>
    %36 = vector.multi_reduction <add>, %35, %cst_13 [1, 2] : vector<1x8x256xf32> to vector<1xf32>
    %37 = vector.shape_cast %36 : vector<1xf32> to vector<1x1x1xf32>
    %38 = vector.extract %37[0, 0, 0] : f32 from vector<1x1x1xf32>
    %39 = vector.shape_cast %14 : vector<8x1xf32> to vector<1x8x1xf32>
    %cst_14 = arith.constant dense<0.000000e+00> : vector<1xf32>
    %40 = vector.multi_reduction <add>, %39, %cst_14 [1, 2] : vector<1x8x1xf32> to vector<1xf32>
    %41 = vector.shape_cast %40 : vector<1xf32> to vector<1x1x1xf32>
    %42 = vector.extract %41[0, 0, 0] : f32 from vector<1x1x1xf32>
    %c0_i32 = arith.constant 0 : i32
    %43 = vector.broadcast %c0_i32 : i32 to vector<8x128xi32>
    %44 = arith.cmpi eq, %0, %43 : vector<8x128xi32>
    %c0_i32_15 = arith.constant 0 : i32
    %45 = vector.broadcast %c0_i32_15 : i32 to vector<8x128xi32>
    %46 = arith.cmpi eq, %1, %45 : vector<8x128xi32>
    %47 = arith.andi %44, %46 : vector<8x128xi1>
    %48 = vector.broadcast %38 : f32 to vector<8x128xf32>
    %49 = arith.select %47, %48, %2 : vector<8x128xi1>, vector<8x128xf32>
    %c1_i32 = arith.constant 1 : i32
    %50 = vector.broadcast %c1_i32 : i32 to vector<8x128xi32>
    %51 = arith.cmpi eq, %0, %50 : vector<8x128xi32>
    %c0_i32_16 = arith.constant 0 : i32
    %52 = vector.broadcast %c0_i32_16 : i32 to vector<8x128xi32>
    %53 = arith.cmpi eq, %1, %52 : vector<8x128xi32>
    %54 = arith.andi %51, %53 : vector<8x128xi1>
    %55 = vector.broadcast %42 : f32 to vector<8x128xf32>
    %56 = arith.select %54, %55, %49 : vector<8x128xi1>, vector<8x128xf32>
    %c0_17 = arith.constant 0 : index
    %c0_18 = arith.constant 0 : index
    %57 = vector.load %arg3[%c0_17, %c0_18] : memref<8x256xf32, #tpu.memory_space<vmem>>, vector<8x256xf32>
    %cst_19 = arith.constant dense<0.000000e+00> : vector<8xf32>
    %58 = vector.multi_reduction <add>, %57, %cst_19 [1] : vector<8x256xf32> to vector<8xf32>
    %59 = vector.shape_cast %58 : vector<8xf32> to vector<8x1xf32>
    %cst_20 = arith.constant 0.000000e+00 : f32
    %60 = vector.broadcast %cst_20 : f32 to vector<8x1xf32>
    %61 = arith.cmpf one, %59, %60 : vector<8x1xf32>
    %62 = arith.extui %61 : vector<8x1xi1> to vector<8x1xi32>
    %63 = arith.sitofp %62 : vector<8x1xi32> to vector<8x1xf32>
    %cst_21 = arith.constant 1.000000e-07 : f32
    %cst_22 = arith.constant 0.99999988 : f32
    %64 = vector.broadcast %cst_21 : f32 to vector<8x256xf32>
    %65 = arith.maximumf %64, %57 : vector<8x256xf32>
    %66 = vector.broadcast %cst_22 : f32 to vector<8x256xf32>
    %67 = arith.minimumf %66, %65 : vector<8x256xf32>
    %cst_23 = arith.constant 2.000000e+00 : f32
    %68 = vector.broadcast %cst_23 : f32 to vector<8x256xf32>
    %69 = arith.mulf %68, %67 : vector<8x256xf32>
    %cst_24 = arith.constant 1.000000e+00 : f32
    %70 = vector.broadcast %cst_24 : f32 to vector<8x256xf32>
    %71 = arith.subf %69, %70 : vector<8x256xf32>
    %72 = arith.mulf %3, %71 : vector<8x256xf32>
    %cst_25 = arith.constant 1.000000e+00 : f32
    %73 = vector.broadcast %cst_25 : f32 to vector<8x256xf32>
    %74 = arith.subf %73, %67 : vector<8x256xf32>
    %75 = arith.addf %72, %74 : vector<8x256xf32>
    %cst_26 = arith.constant 1.000000e+00 : f32
    %76 = vector.broadcast %cst_26 : f32 to vector<8x256xf32>
    %77 = arith.subf %76, %75 : vector<8x256xf32>
    %78 = arith.mulf %77, %77 : vector<8x256xf32>
    %79 = arith.mulf %7, %78 : vector<8x256xf32>
    %80 = math.log %75 : vector<8x256xf32>
    %81 = arith.mulf %79, %80 : vector<8x256xf32>
    %82 = vector.broadcast %63 : vector<8x1xf32> to vector<8x256xf32>
    %83 = arith.mulf %81, %82 : vector<8x256xf32>
    %84 = vector.shape_cast %83 : vector<8x256xf32> to vector<1x8x256xf32>
    %cst_27 = arith.constant dense<0.000000e+00> : vector<1xf32>
    %85 = vector.multi_reduction <add>, %84, %cst_27 [1, 2] : vector<1x8x256xf32> to vector<1xf32>
    %86 = vector.shape_cast %85 : vector<1xf32> to vector<1x1x1xf32>
    %87 = vector.extract %86[0, 0, 0] : f32 from vector<1x1x1xf32>
    %88 = vector.shape_cast %63 : vector<8x1xf32> to vector<1x8x1xf32>
    %cst_28 = arith.constant dense<0.000000e+00> : vector<1xf32>
    %89 = vector.multi_reduction <add>, %88, %cst_28 [1, 2] : vector<1x8x1xf32> to vector<1xf32>
    %90 = vector.shape_cast %89 : vector<1xf32> to vector<1x1x1xf32>
    %91 = vector.extract %90[0, 0, 0] : f32 from vector<1x1x1xf32>
    %c0_i32_29 = arith.constant 0 : i32
    %92 = vector.broadcast %c0_i32_29 : i32 to vector<8x128xi32>
    %93 = arith.cmpi eq, %0, %92 : vector<8x128xi32>
    %c1_i32_30 = arith.constant 1 : i32
    %94 = vector.broadcast %c1_i32_30 : i32 to vector<8x128xi32>
    %95 = arith.cmpi eq, %1, %94 : vector<8x128xi32>
    %96 = arith.andi %93, %95 : vector<8x128xi1>
    %97 = vector.broadcast %87 : f32 to vector<8x128xf32>
    %98 = arith.select %96, %97, %56 : vector<8x128xi1>, vector<8x128xf32>
    %c1_i32_31 = arith.constant 1 : i32
    %99 = vector.broadcast %c1_i32_31 : i32 to vector<8x128xi32>
    %100 = arith.cmpi eq, %0, %99 : vector<8x128xi32>
    %c1_i32_32 = arith.constant 1 : i32
    %101 = vector.broadcast %c1_i32_32 : i32 to vector<8x128xi32>
    %102 = arith.cmpi eq, %1, %101 : vector<8x128xi32>
    %103 = arith.andi %100, %102 : vector<8x128xi1>
    %104 = vector.broadcast %91 : f32 to vector<8x128xf32>
    %105 = arith.select %103, %104, %98 : vector<8x128xi1>, vector<8x128xf32>
    %c0_33 = arith.constant 0 : index
    %c0_34 = arith.constant 0 : index
    %106 = vector.load %arg4[%c0_33, %c0_34] : memref<8x256xf32, #tpu.memory_space<vmem>>, vector<8x256xf32>
    %cst_35 = arith.constant dense<0.000000e+00> : vector<8xf32>
    %107 = vector.multi_reduction <add>, %106, %cst_35 [1] : vector<8x256xf32> to vector<8xf32>
    %108 = vector.shape_cast %107 : vector<8xf32> to vector<8x1xf32>
    %cst_36 = arith.constant 0.000000e+00 : f32
    %109 = vector.broadcast %cst_36 : f32 to vector<8x1xf32>
    %110 = arith.cmpf one, %108, %109 : vector<8x1xf32>
    %111 = arith.extui %110 : vector<8x1xi1> to vector<8x1xi32>
    %112 = arith.sitofp %111 : vector<8x1xi32> to vector<8x1xf32>
    %cst_37 = arith.constant 1.000000e-07 : f32
    %cst_38 = arith.constant 0.99999988 : f32
    %113 = vector.broadcast %cst_37 : f32 to vector<8x256xf32>
    %114 = arith.maximumf %113, %106 : vector<8x256xf32>
    %115 = vector.broadcast %cst_38 : f32 to vector<8x256xf32>
    %116 = arith.minimumf %115, %114 : vector<8x256xf32>
    %cst_39 = arith.constant 2.000000e+00 : f32
    %117 = vector.broadcast %cst_39 : f32 to vector<8x256xf32>
    %118 = arith.mulf %117, %116 : vector<8x256xf32>
    %cst_40 = arith.constant 1.000000e+00 : f32
    %119 = vector.broadcast %cst_40 : f32 to vector<8x256xf32>
    %120 = arith.subf %118, %119 : vector<8x256xf32>
    %121 = arith.mulf %3, %120 : vector<8x256xf32>
    %cst_41 = arith.constant 1.000000e+00 : f32
    %122 = vector.broadcast %cst_41 : f32 to vector<8x256xf32>
    %123 = arith.subf %122, %116 : vector<8x256xf32>
    %124 = arith.addf %121, %123 : vector<8x256xf32>
    %cst_42 = arith.constant 1.000000e+00 : f32
    %125 = vector.broadcast %cst_42 : f32 to vector<8x256xf32>
    %126 = arith.subf %125, %124 : vector<8x256xf32>
    %127 = arith.mulf %126, %126 : vector<8x256xf32>
    %128 = arith.mulf %7, %127 : vector<8x256xf32>
    %129 = math.log %124 : vector<8x256xf32>
    %130 = arith.mulf %128, %129 : vector<8x256xf32>
    %131 = vector.broadcast %112 : vector<8x1xf32> to vector<8x256xf32>
    %132 = arith.mulf %130, %131 : vector<8x256xf32>
    %133 = vector.shape_cast %132 : vector<8x256xf32> to vector<1x8x256xf32>
    %cst_43 = arith.constant dense<0.000000e+00> : vector<1xf32>
    %134 = vector.multi_reduction <add>, %133, %cst_43 [1, 2] : vector<1x8x256xf32> to vector<1xf32>
    %135 = vector.shape_cast %134 : vector<1xf32> to vector<1x1x1xf32>
    %136 = vector.extract %135[0, 0, 0] : f32 from vector<1x1x1xf32>
    %137 = vector.shape_cast %112 : vector<8x1xf32> to vector<1x8x1xf32>
    %cst_44 = arith.constant dense<0.000000e+00> : vector<1xf32>
    %138 = vector.multi_reduction <add>, %137, %cst_44 [1, 2] : vector<1x8x1xf32> to vector<1xf32>
    %139 = vector.shape_cast %138 : vector<1xf32> to vector<1x1x1xf32>
    %140 = vector.extract %139[0, 0, 0] : f32 from vector<1x1x1xf32>
    %c0_i32_45 = arith.constant 0 : i32
    %141 = vector.broadcast %c0_i32_45 : i32 to vector<8x128xi32>
    %142 = arith.cmpi eq, %0, %141 : vector<8x128xi32>
    %c2_i32 = arith.constant 2 : i32
    %143 = vector.broadcast %c2_i32 : i32 to vector<8x128xi32>
    %144 = arith.cmpi eq, %1, %143 : vector<8x128xi32>
    %145 = arith.andi %142, %144 : vector<8x128xi1>
    %146 = vector.broadcast %136 : f32 to vector<8x128xf32>
    %147 = arith.select %145, %146, %105 : vector<8x128xi1>, vector<8x128xf32>
    %c1_i32_46 = arith.constant 1 : i32
    %148 = vector.broadcast %c1_i32_46 : i32 to vector<8x128xi32>
    %149 = arith.cmpi eq, %0, %148 : vector<8x128xi32>
    %c2_i32_47 = arith.constant 2 : i32
    %150 = vector.broadcast %c2_i32_47 : i32 to vector<8x128xi32>
    %151 = arith.cmpi eq, %1, %150 : vector<8x128xi32>
    %152 = arith.andi %149, %151 : vector<8x128xi1>
    %153 = vector.broadcast %140 : f32 to vector<8x128xf32>
    %154 = arith.select %152, %153, %147 : vector<8x128xi1>, vector<8x128xf32>
    %c0_48 = arith.constant 0 : index
    %c0_49 = arith.constant 0 : index
    %c0_50 = arith.constant 0 : index
    %155 = vector.load %arg5[%c0_48, %c0_49, %c0_50] : memref<1x8x128xf32, #tpu.memory_space<vmem>>, vector<1x8x128xf32>
    %156 = vector.shape_cast %155 : vector<1x8x128xf32> to vector<8x128xf32>
    %157 = vector.shape_cast %154 : vector<8x128xf32> to vector<1x8x128xf32>
    tpu.vector_store %arg5[%c0_48, %c0_49, %c0_50], %157 {strides = array<i32>} : memref<1x8x128xf32, #tpu.memory_space<vmem>>, vector<1x8x128xf32>,
    return
  }
  func.func @transform_0(%arg0: i32) -> (i32, i32) {
    %c0_i32 = arith.constant 0 : i32
    %c0_i32_0 = arith.constant 0 : i32
    return %arg0, %c0_i32 : i32, i32
  }
  func.func @transform_1(%arg0: i32) -> (i32, i32) {
    %c0_i32 = arith.constant 0 : i32
    %c0_i32_0 = arith.constant 0 : i32
    return %arg0, %c0_i32 : i32, i32
  }
  func.func @transform_2(%arg0: i32) -> (i32, i32) {
    %c0_i32 = arith.constant 0 : i32
    %c0_i32_0 = arith.constant 0 : i32
    return %arg0, %c0_i32 : i32, i32
  }
  func.func @transform_3(%arg0: i32) -> (i32, i32) {
    %c0_i32 = arith.constant 0 : i32
    %c0_i32_0 = arith.constant 0 : i32
    return %arg0, %c0_i32 : i32, i32
  }
  func.func @transform_4(%arg0: i32) -> (i32, i32, i32) {
    %c0_i32 = arith.constant 0 : i32
    %c0_i32_0 = arith.constant 0 : i32
    %c0_i32_1 = arith.constant 0 : i32
    return %arg0, %c0_i32, %c0_i32_0 : i32, i32, i32
  }
}

</mosaic_0001>

<llo_original>
// kernel: score_loss.1
$region0: #{score_loss.1}
  #allocation0 [shape = 'u32[]', space=smem, size = 0x4, offset = 0x4, fixed_abs, tag = 'smem constant byte address 0x4 - core index']
  #allocation1 [shape = 'u32[144,128]{1,0:T(1,128)}', space=vmem, size = 0x12000, scoped, tag = 'internal scratch']
  %s0 = inlined_call_operand.vmem [shape: f32[8,256], index: 0, kind: input, shape index: {}]
  %s1 = inlined_call_operand.vmem [shape: f32[8,256], index: 1, kind: input, shape index: {}]
  %s2 = inlined_call_operand.vmem [shape: f32[8,256], index: 2, kind: input, shape index: {}]
  %s3 = inlined_call_operand.vmem [shape: f32[8,256], index: 3, kind: input, shape index: {}]
  %s4 = inlined_call_operand.vmem [shape: f32[1,8,128], index: 4, kind: output, shape index: {}]
  %s5 = sld [smem:[#allocation0]]
  $region26: #{score_loss.1} parent=0
    _
  %s7 = ssub.s32 1, %s5
  %s8 = scalar_select 0, %s7, %s5
  // Predicated region
  $region2: #{score_loss.1} parent=0 // pred_check
    _
  $region3: #{score_loss.1} parent=0 // pred_check_branch
    %10 = sbr.rel (0) target = $region5
  $region4: #{score_loss.1} parent=0 // pred_region
    _
  $region5: #{score_loss.1} parent=0 // pred_fallthru
    _
  // Predicated region
  $region6: #{score_loss.1} parent=0 // pred_check
    _
  $region7: #{score_loss.1} parent=0 // pred_check_branch
    %12 = sbr.rel (0) target = $region9
  $region8: #{score_loss.1} parent=0 // pred_region
    _
  $region9: #{score_loss.1} parent=0 // pred_fallthru
    _
  // Predicated region
  $region10: #{score_loss.1} parent=0 // pred_check
    _
  $region11: #{score_loss.1} parent=0 // pred_check_branch
    %14 = sbr.rel (0) target = $region13
  $region12: #{score_loss.1} parent=0 // pred_region
    _
  $region13: #{score_loss.1} parent=0 // pred_fallthru
    _
  // Predicated region
  $region14: #{score_loss.1} parent=0 // pred_check
    _
  $region15: #{score_loss.1} parent=0 // pred_check_branch
    %16 = sbr.rel (0) target = $region17
  $region16: #{score_loss.1} parent=0 // pred_region
    _
  $region17: #{score_loss.1} parent=0 // pred_fallthru
    _
  %v17 = vlaneseq
  %v18 = vshrl.u32 %v17, 7
  %v19 = vlaneseq
  %v20 = vand.u32 %v19, 127
  %v21 = vld [vmem:[%s0] sm:$0xff]
  %v22 = vld [vmem:[%s0 + $0x8] sm:$0xff]
  %v23 = vmul.f32 %v21, 0.5
  %v24 = vmul.f32 %v22, 0.5
  %v25 = vadd.f32 %v23, -0.75
  %v26 = vadd.f32 %v24, -0.75
  %v27 = vld [vmem:[%s1] sm:$0xff]
  %v28 = vld [vmem:[%s1 + $0x8] sm:$0xff]
  %v29 = vadd.f32 %v27, %v28
  %30 = vadd.xlane.f32.xlu0 %v29
  %v31 = vpop.xlane.xlu0 %30
  %vm32 = vcmp.ne.f32.partialorder %v31, 0.0
  %v33 = vsel %vm32, 1, 0
  %v34 = vcvt.s32.f32 %v33
  %v35 = vmax.f32 %v27, 1e-07
  %v36 = vmax.f32 %v28, 1e-07
  %v37 = vmin.f32 %v35, 0.9999999
  %v38 = vmin.f32 %v36, 0.9999999
  %v39 = vmul.f32 %v37, 2.0
  %v40 = vmul.f32 %v38, 2.0
  %v41 = vsub.f32 %v39, 1.0
  %v42 = vsub.f32 %v40, 1.0
  %v43 = vmul.f32 %v21, %v41
  %v44 = vmul.f32 %v22, %v42
  %v45 = vsub.f32 1.0, %v37
  %v46 = vsub.f32 1.0, %v38
  %v47 = vadd.f32 %v43, %v45
  %v48 = vadd.f32 %v44, %v46
  %v49 = vsub.f32 1.0, %v47
  %v50 = vsub.f32 1.0, %v48
  %v51 = vmul.f32 %v49, %v49
  %v52 = vmul.f32 %v50, %v50
  %v53 = vmul.f32 %v25, %v51
  %v54 = vmul.f32 %v26, %v52
  %v55 = vlog2.pop %v47
  %v56 = vmul.f32 %v55, 0.6931472
  %v57 = vlog2.pop %v48
  %v58 = vmul.f32 %v57, 0.6931472
  %v59 = vmul.f32 %v53, %v56
  %v60 = vmul.f32 %v54, %v58
  %v61 = vmul.f32 %v59, %v34
  %v62 = vmul.f32 %v60, %v34
  %v63 = vadd.f32 %v61, %v62
  %64 = vadd.xlane.f32.xlu0 %v63
  %v65 = vpop.xlane.xlu0 %64
  %v66 = vrot.slane %v65, 4
  %v67 = vadd.f32 %v65, %v66
  %v68 = vrot.slane %v67, 2
  %v69 = vadd.f32 %v67, %v68
  %v70 = vrot.slane %v69, 1
  %v71 = vadd.f32 %v69, %v70
  %s72 = vtos %v71
  %vm73 = vcmask 7168
  %v74 = vsel %vm73, %v34, 0.0
  %75 = vadd.xlane.f32.xlu0 %v74
  %v76 = vpop.xlane.xlu0 %75
  %v77 = vrot.slane %v76, 4
  %v78 = vadd.f32 %v76, %v77
  %v79 = vrot.slane %v78, 2
  %v80 = vadd.f32 %v78, %v79
  %v81 = vrot.slane %v80, 1
  %v82 = vadd.f32 %v80, %v81
  %s83 = vtos %v82
  %vm84 = vcmp.eq.s32.totalorder %v18, 0
  %vm85 = vcmp.eq.s32.totalorder %v20, 0
  %vm86 = vmand %vm84, %vm85
  %v87 = vstv %s72
  %v88 = vsel %vm86, %v87, 0.0
  %vm89 = vcmp.eq.s32.totalorder %v18, 1
  %vm90 = vmand %vm89, %vm85
  %v91 = vstv %s83
  %v92 = vsel %vm90, %v91, %v88
  %v93 = vld [vmem:[%s2] sm:$0xff]
  %v94 = vld [vmem:[%s2 + $0x8] sm:$0xff]
  %v95 = vadd.f32 %v93, %v94
  %96 = vadd.xlane.f32.xlu0 %v95
  %v97 = vpop.xlane.xlu0 %96
  %vm98 = vcmp.ne.f32.partialorder %v97, 0.0
  %v99 = vsel %vm98, 1, 0
  %v100 = vcvt.s32.f32 %v99
  %v101 = vmax.f32 %v93, 1e-07
  %v102 = vmax.f32 %v94, 1e-07
  %v103 = vmin.f32 %v101, 0.9999999
  %v104 = vmin.f32 %v102, 0.9999999
  %v105 = vmul.f32 %v103, 2.0
  %v106 = vmul.f32 %v104, 2.0
  %v107 = vsub.f32 %v105, 1.0
  %v108 = vsub.f32 %v106, 1.0
  %v109 = vmul.f32 %v21, %v107
  %v110 = vmul.f32 %v22, %v108
  %v111 = vsub.f32 1.0, %v103
  %v112 = vsub.f32 1.0, %v104
  %v113 = vadd.f32 %v109, %v111
  %v114 = vadd.f32 %v110, %v112
  %v115 = vsub.f32 1.0, %v113
  %v116 = vsub.f32 1.0, %v114
  %v117 = vmul.f32 %v115, %v115
  %v118 = vmul.f32 %v116, %v116
  %v119 = vmul.f32 %v25, %v117
  %v120 = vmul.f32 %v26, %v118
  %v121 = vlog2.pop %v113
  %v122 = vmul.f32 %v121, 0.6931472
  %v123 = vlog2.pop %v114
  %v124 = vmul.f32 %v123, 0.6931472
  %v125 = vmul.f32 %v119, %v122
  %v126 = vmul.f32 %v120, %v124
  %v127 = vmul.f32 %v125, %v100
  %v128 = vmul.f32 %v126, %v100
  %v129 = vadd.f32 %v127, %v128
  %130 = vadd.xlane.f32.xlu0 %v129
  %v131 = vpop.xlane.xlu0 %130
  %v132 = vrot.slane %v131, 4
  %v133 = vadd.f32 %v131, %v132
  %v134 = vrot.slane %v133, 2
  %v135 = vadd.f32 %v133, %v134
  %v136 = vrot.slane %v135, 1
  %v137 = vadd.f32 %v135, %v136
  %s138 = vtos %v137
  %v139 = vsel %vm73, %v100, 0.0
  %140 = vadd.xlane.f32.xlu0 %v139
  %v141 = vpop.xlane.xlu0 %140
  %v142 = vrot.slane %v141, 4
  %v143 = vadd.f32 %v141, %v142
  %v144 = vrot.slane %v143, 2
  %v145 = vadd.f32 %v143, %v144
  %v146 = vrot.slane %v145, 1
  %v147 = vadd.f32 %v145, %v146
  %s148 = vtos %v147
  %vm149 = vcmp.eq.s32.totalorder %v20, 1
  %vm150 = vmand %vm84, %vm149
  %v151 = vstv %s138
  %v152 = vsel %vm150, %v151, %v92
  %vm153 = vmand %vm89, %vm149
  %v154 = vstv %s148
  %v155 = vsel %vm153, %v154, %v152
  %v156 = vld [vmem:[%s3] sm:$0xff]
  %v157 = vld [vmem:[%s3 + $0x8] sm:$0xff]
  %v158 = vadd.f32 %v156, %v157
  %159 = vadd.xlane.f32.xlu0 %v158
  %v160 = vpop.xlane.xlu0 %159
  %vm161 = vcmp.ne.f32.partialorder %v160, 0.0
  %v162 = vsel %vm161, 1, 0
  %v163 = vcvt.s32.f32 %v162
  %v164 = vmax.f32 %v156, 1e-07
  %v165 = vmax.f32 %v157, 1e-07
  %v166 = vmin.f32 %v164, 0.9999999
  %v167 = vmin.f32 %v165, 0.9999999
  %v168 = vmul.f32 %v166, 2.0
  %v169 = vmul.f32 %v167, 2.0
  %v170 = vsub.f32 %v168, 1.0
  %v171 = vsub.f32 %v169, 1.0
  %v172 = vmul.f32 %v21, %v170
  %v173 = vmul.f32 %v22, %v171
  %v174 = vsub.f32 1.0, %v166
  %v175 = vsub.f32 1.0, %v167
  %v176 = vadd.f32 %v172, %v174
  %v177 = vadd.f32 %v173, %v175
  %v178 = vsub.f32 1.0, %v176
  %v179 = vsub.f32 1.0, %v177
  %v180 = vmul.f32 %v178, %v178
  %v181 = vmul.f32 %v179, %v179
  %v182 = vmul.f32 %v25, %v180
  %v183 = vmul.f32 %v26, %v181
  %v184 = vlog2.pop %v176
  %v185 = vmul.f32 %v184, 0.6931472
  %v186 = vlog2.pop %v177
  %v187 = vmul.f32 %v186, 0.6931472
  %v188 = vmul.f32 %v182, %v185
  %v189 = vmul.f32 %v183, %v187
  %v190 = vmul.f32 %v188, %v163
  %v191 = vmul.f32 %v189, %v163
  %v192 = vadd.f32 %v190, %v191
  %193 = vadd.xlane.f32.xlu0 %v192
  %v194 = vpop.xlane.xlu0 %193
  %v195 = vrot.slane %v194, 4
  %v196 = vadd.f32 %v194, %v195
  %v197 = vrot.slane %v196, 2
  %v198 = vadd.f32 %v196, %v197
  %v199 = vrot.slane %v198, 1
  %v200 = vadd.f32 %v198, %v199
  %s201 = vtos %v200
  %v202 = vsel %vm73, %v163, 0.0
  %203 = vadd.xlane.f32.xlu0 %v202
  %v204 = vpop.xlane.xlu0 %203
  %v205 = vrot.slane %v204, 4
  %v206 = vadd.f32 %v204, %v205
  %v207 = vrot.slane %v206, 2
  %v208 = vadd.f32 %v206, %v207
  %v209 = vrot.slane %v208, 1
  %v210 = vadd.f32 %v208, %v209
  %s211 = vtos %v210
  %vm212 = vcmp.eq.s32.totalorder %v20, 2
  %vm213 = vmand %vm84, %vm212
  %v214 = vstv %s201
  %v215 = vsel %vm213, %v214, %v155
  %vm216 = vmand %vm89, %vm212
  %v217 = vstv %s211
  %v218 = vsel %vm216, %v217, %v215
  %219 = vst [vmem:[%s4] sm:$0xff] %v218
  // Predicated region
  $region18: #{score_loss.1} parent=0 // pred_check
    _
  $region19: #{score_loss.1} parent=0 // pred_check_branch
    %221 = sbr.rel (0) target = $region21
  $region20: #{score_loss.1} parent=0 // pred_region
    _
  $region21: #{score_loss.1} parent=0 // pred_fallthru
    _
  // Predicated region
  $region22: #{score_loss.1} parent=0 // pred_check
    _
  $region23: #{score_loss.1} parent=0 // pred_check_branch
    %223 = sbr.rel (0) target = $region25
  $region24: #{score_loss.1} parent=0 // pred_region
    _
  $region25: #{score_loss.1} parent=0 // pred_fallthru
    _

</llo_original>
